<compile_context>
chip_gen: v7x
topology: tpu7x:2x2x1
jax: 0.10.0
libtpu: 0.0.40
codegen_flags: <defaults>
</compile_context>

<pallas_src>
import jax
import jax.numpy as jnp
from jax.experimental import pallas as pl
from jax.experimental.pallas import tpu as pltpu

BN_EPS = 4e-5
_LANE = 128
_MAX_STATS_UNROLL = 32        # cap on TL1/128 lane-blocks unrolled in pass 1
_USE_BF16_MATMUL = False      # bf16-in / f32-acc MXU rate; loosen test tol to ~1e-2 if enabled


def _vmem_budgets():
    """(per-step tile budget bytes, scoped vmem limit bytes) per TPU generation."""
    try:
        cap = pltpu.get_tpu_info().vmem_capacity_bytes
    except Exception:
        cap = 0
    if cap >= 100 * 1024 * 1024:                 # v5e / v6e: 128 MiB physical VMEM
        return 12 * 1024 * 1024, 64 * 1024 * 1024
    if cap > 0:                                  # v7x: 64 MiB physical VMEM
        return 6 * 1024 * 1024, 40 * 1024 * 1024
    return 4 * 1024 * 1024, 32 * 1024 * 1024     # unknown: conservative


def _choose_tile(hw_padded, per_lane_bytes, budget_bytes, max_tile=None):
    """Largest multiple of 128 that divides hw_padded and fits the byte budget."""
    best = _LANE
    t = _LANE
    while t <= hw_padded:
        if (hw_padded % t == 0 and t * per_lane_bytes <= budget_bytes
                and (max_tile is None or t <= max_tile)):
            best = t
        t += _LANE
    return best


def _stats_kernel(x_ref, w_ref, sum_ref, sq_ref):
    """Pass 1: per-batch, per-lane partial sum / sum-of-squares of y = W @ x."""
    @pl.when(pl.program_id(1) == 0)
    def _():
        sum_ref[...] = jnp.zeros_like(sum_ref)
        sq_ref[...] = jnp.zeros_like(sq_ref)

    w = w_ref[...]
    if _USE_BF16_MATMUL:
        w = w.astype(jnp.bfloat16)
    tl = x_ref.shape[-1]
    s = sum_ref[...]
    q = sq_ref[...]
    # Lane-aligned 128-wide blocks: accumulation is pure per-vreg VPU adds
    # (no XLU cross-lane reduce, no masked 1-lane accumulator stores).
    for j in range(tl // _LANE):
        xj = x_ref[:, j * _LANE:(j + 1) * _LANE]
        if _USE_BF16_MATMUL:
            xj = xj.astype(jnp.bfloat16)
        yj = jnp.dot(w, xj, preferred_element_type=jnp.float32)
        s = s + yj
        q = q + yj * yj
    sum_ref[...] = s
    sq_ref[...] = q


def _apply_kernel(x_ref, w_ref, shift_ref, o_ref):
    """Pass 2: y = (scale*W) @ x, then + shift, ReLU (BN scale folded into W)."""
    w = w_ref[...]
    x = x_ref[...]
    if _USE_BF16_MATMUL:
        w = w.astype(jnp.bfloat16)
        x = x.astype(jnp.bfloat16)
    y = jnp.dot(w, x, preferred_element_type=jnp.float32)
    o_ref[...] = jnp.maximum(y + shift_ref[...], 0.0).astype(o_ref.dtype)


def conv_block(x, conv_w, conv_b, bn_gamma, bn_beta):
    """Forward of ConvBlock (kernel_size=1): x (N,Cin,H,W) f32, conv_w (Cout,Cin,1,1),
    conv_b/bn_gamma/bn_beta (Cout,)."""
    del conv_b  # cancels exactly under train-mode BatchNorm mean subtraction
    N, Cin, H, W = x.shape
    Cout = conv_w.shape[0]
    HW = H * W

    budget, vmem_limit = _vmem_budgets()

    # NCHW-native view; zero-pad the spatial axis to a lane multiple.  Padded
    # columns produce y == 0 (no bias), contributing nothing to sum / sum-sq.
    x3 = x.reshape(N, Cin, HW)
    hw_p = ((HW + _LANE - 1) // _LANE) * _LANE
    if hw_p != HW:
        x3 = jnp.pad(x3, ((0, 0), (0, 0), (0, hw_p - HW)))
    wm = conv_w.reshape(Cout, Cin).astype(jnp.float32)

    # ---- pass 1: batch statistics (per-batch lane-wide partial accumulators) ----
    per_lane1 = (2 * Cin + Cout) * 4                       # dbl-buffered x tile (+ slack)
    tl1 = _choose_tile(hw_p, per_lane1, budget,
                       max_tile=_MAX_STATS_UNROLL * _LANE)
    grid1 = (N, hw_p // tl1)

    x_spec1 = pl.BlockSpec((None, Cin, tl1), lambda n, l: (n, 0, l))
    w_spec = pl.BlockSpec((Cout, Cin), lambda n, l: (0, 0))        # VMEM-resident
    acc_spec = pl.BlockSpec((None, Cout, _LANE), lambda n, l: (n, 0, 0))

    s_sum, s_sq = pl.pallas_call(
        _stats_kernel,
        out_shape=(jax.ShapeDtypeStruct((N, Cout, _LANE), jnp.float32),
                   jax.ShapeDtypeStruct((N, Cout, _LANE), jnp.float32)),
        grid=grid1,
        in_specs=[x_spec1, w_spec],
        out_specs=(acc_spec, acc_spec),
        compiler_params=pltpu.CompilerParams(
            dimension_semantics=("parallel", "arbitrary"),
            vmem_limit_bytes=vmem_limit),
    )(x3, wm)

    # ---- fold BN (train-mode batch stats, biased variance, eps=4e-5) -----------
    count = jnp.float32(N * HW)                            # true count (excludes padding)
    total = jnp.sum(s_sum, axis=(0, 2))                    # (Cout,)
    total_sq = jnp.sum(s_sq, axis=(0, 2))                  # (Cout,)
    mean = total / count
    var = jnp.maximum(total_sq / count - mean * mean, 0.0)  # clamp: one-pass var
    inv_std = jax.lax.rsqrt(var + BN_EPS)
    scale = bn_gamma.astype(jnp.float32) * inv_std
    shift = (bn_beta.astype(jnp.float32) - mean * scale).reshape(Cout, 1)
    w_scaled = wm * scale[:, None]                         # fold scale into the weight

    # ---- pass 2: (scale*W) @ x + shift, ReLU (fully parallel, lane-dense) ------
    per_lane2 = (2 * Cin + 3 * Cout) * 4                   # dbl-buffered x + out + y temp
    tl2 = _choose_tile(hw_p, per_lane2, budget)
    grid2 = (N, hw_p // tl2)

    x_spec2 = pl.BlockSpec((None, Cin, tl2), lambda n, l: (n, 0, l))
    w_spec2 = pl.BlockSpec((Cout, Cin), lambda n, l: (0, 0))
    shift_spec = pl.BlockSpec((Cout, 1), lambda n, l: (0, 0))
    out_spec = pl.BlockSpec((None, Cout, tl2), lambda n, l: (n, 0, l))

    out = pl.pallas_call(
        _apply_kernel,
        out_shape=jax.ShapeDtypeStruct((N, Cout, hw_p), x.dtype),
        grid=grid2,
        in_specs=[x_spec2, w_spec2, shift_spec],
        out_specs=out_spec,
        compiler_params=pltpu.CompilerParams(
            dimension_semantics=("parallel", "parallel"),
            vmem_limit_bytes=vmem_limit),
    )(x3, w_scaled, shift)

    if hw_p != HW:
        out = out[:, :, :HW]
    return out.reshape(N, Cout, H, W)


def _reference(x, conv_w, conv_b, bn_gamma, bn_beta):
    # pure-JAX reference of the same forward pass (training-mode BN)
    y = jax.lax.conv_general_dilated(
        x, conv_w, window_strides=(1, 1), padding="VALID",
        dimension_numbers=("NCHW", "OIHW", "NCHW"))
    y = y + conv_b[None, :, None, None]
    mean = jnp.mean(y, axis=(0, 2, 3), keepdims=True)
    var = jnp.mean((y - mean) ** 2, axis=(0, 2, 3), keepdims=True)
    y = (y - mean) * jax.lax.rsqrt(var + BN_EPS)
    y = y * bn_gamma[None, :, None, None] + bn_beta[None, :, None, None]
    return jnp.maximum(y, 0.0)


if __name__ == "__main__":
    key = jax.random.PRNGKey(0)
    k_x, k_w, k_b, k_g, k_t = jax.random.split(key, 5)

    N, Cin, Cout, H, W = 2, 4, 8, 16, 16

    x = jax.random.normal(k_x, (N, Cin, H, W), dtype=jnp.float32)
    conv_w = jax.random.normal(k_w, (Cout, Cin, 1, 1), dtype=jnp.float32) * 0.1
    conv_b = jax.random.normal(k_b, (Cout,), dtype=jnp.float32) * 0.1
    bn_gamma = 1.0 + 0.1 * jax.random.normal(k_g, (Cout,), dtype=jnp.float32)
    bn_beta = 0.1 * jax.random.normal(k_t, (Cout,), dtype=jnp.float32)

    out = conv_block(x, conv_w, conv_b, bn_gamma, bn_beta)
    out = jax.block_until_ready(out)

    ref = _reference(x, conv_w, conv_b, bn_gamma, bn_beta)
    assert out.shape == (N, Cout, H, W)
    assert jnp.allclose(out, ref, atol=1e-4, rtol=1e-4), float(jnp.max(jnp.abs(out - ref)))

    print("KERNEL_OK")
</pallas_src>

<mosaic_0001>
module attributes {stable_mosaic.version = 11 : i64} {
  func.func @_stats_kernel(%arg0: i32, %arg1: i32, %arg2: memref<1x4x256xf32, #tpu.memory_space<vmem>>, %arg3: memref<8x4xf32, #tpu.memory_space<vmem>>, %arg4: memref<1x8x128xf32, #tpu.memory_space<vmem>>, %arg5: memref<1x8x128xf32, #tpu.memory_space<vmem>>) attributes {dimension_semantics = [#tpu.dimension_semantics<parallel>, #tpu.dimension_semantics<arbitrary>], iteration_bounds = array<i64: 2, 1>, scalar_prefetch = 0 : i64, scratch_operands = 0 : i64, tpu.core_type = #tpu.core_type<tc>, window_params = [{transform_indices = @transform_0, window_bounds = array<i64: 1, 4, 256>}, {pipeline_mode = #tpu.pipeline_mode<synchronous>, transform_indices = @transform_1, window_bounds = array<i64: 8, 4>}, {transform_indices = @transform_2, window_bounds = array<i64: 1, 8, 128>}, {transform_indices = @transform_3, window_bounds = array<i64: 1, 8, 128>}]} {
    %c0_i32 = arith.constant 0 : i32
    %0 = arith.cmpi eq, %arg1, %c0_i32 : i32
    %1 = arith.extui %0 : i1 to i32
    %c0_i32_0 = arith.constant 0 : i32
    %2 = arith.cmpi ne, %1, %c0_i32_0 : i32
    scf.if %2 {
      %cst_20 = arith.constant 0.000000e+00 : f32
      %26 = vector.broadcast %cst_20 : f32 to vector<8x128xf32>
      %c0_21 = arith.constant 0 : index
      %c0_22 = arith.constant 0 : index
      %c0_23 = arith.constant 0 : index
      %27 = vector.load %arg4[%c0_21, %c0_22, %c0_23] : memref<1x8x128xf32, #tpu.memory_space<vmem>>, vector<1x8x128xf32>
      %28 = vector.shape_cast %27 : vector<1x8x128xf32> to vector<8x128xf32>
      %29 = vector.shape_cast %26 : vector<8x128xf32> to vector<1x8x128xf32>
      tpu.vector_store %arg4[%c0_21, %c0_22, %c0_23], %29 {strides = array<i32>} : memref<1x8x128xf32, #tpu.memory_space<vmem>>, vector<1x8x128xf32>,
      %cst_24 = arith.constant 0.000000e+00 : f32
      %30 = vector.broadcast %cst_24 : f32 to vector<8x128xf32>
      %c0_25 = arith.constant 0 : index
      %c0_26 = arith.constant 0 : index
      %c0_27 = arith.constant 0 : index
      %31 = vector.load %arg5[%c0_25, %c0_26, %c0_27] : memref<1x8x128xf32, #tpu.memory_space<vmem>>, vector<1x8x128xf32>
      %32 = vector.shape_cast %31 : vector<1x8x128xf32> to vector<8x128xf32>
      %33 = vector.shape_cast %30 : vector<8x128xf32> to vector<1x8x128xf32>
      tpu.vector_store %arg5[%c0_25, %c0_26, %c0_27], %33 {strides = array<i32>} : memref<1x8x128xf32, #tpu.memory_space<vmem>>, vector<1x8x128xf32>,
    } else {
    }
    %c0 = arith.constant 0 : index
    %c0_1 = arith.constant 0 : index
    %3 = vector.load %arg3[%c0, %c0_1] : memref<8x4xf32, #tpu.memory_space<vmem>>, vector<8x4xf32>
    %c0_2 = arith.constant 0 : index
    %c0_3 = arith.constant 0 : index
    %c0_4 = arith.constant 0 : index
    %4 = vector.load %arg4[%c0_2, %c0_3, %c0_4] : memref<1x8x128xf32, #tpu.memory_space<vmem>>, vector<1x8x128xf32>
    %5 = vector.shape_cast %4 : vector<1x8x128xf32> to vector<8x128xf32>
    %c0_5 = arith.constant 0 : index
    %c0_6 = arith.constant 0 : index
    %c0_7 = arith.constant 0 : index
    %6 = vector.load %arg5[%c0_5, %c0_6, %c0_7] : memref<1x8x128xf32, #tpu.memory_space<vmem>>, vector<1x8x128xf32>
    %7 = vector.shape_cast %6 : vector<1x8x128xf32> to vector<8x128xf32>
    %c0_8 = arith.constant 0 : index
    %c0_9 = arith.constant 0 : index
    %c0_10 = arith.constant 0 : index
    %8 = vector.load %arg2[%c0_8, %c0_9, %c0_10] : memref<1x4x256xf32, #tpu.memory_space<vmem>>, vector<1x4x128xf32>
    %9 = vector.shape_cast %8 : vector<1x4x128xf32> to vector<4x128xf32>
    %cst = arith.constant dense<0.000000e+00> : vector<8x128xf32>
    %10 = tpu.matmul %3, %9, %cst {dimension_numbers = #tpu.dot_dimension_numbers<[1], [0], [0], [1], [0, 0, 1, 1], [], []>} : vector<8x4xf32>, vector<4x128xf32>, vector<8x128xf32> -> vector<8x128xf32>
    %11 = arith.addf %5, %10 : vector<8x128xf32>
    %12 = arith.mulf %10, %10 : vector<8x128xf32>
    %13 = arith.addf %7, %12 : vector<8x128xf32>
    %c0_11 = arith.constant 0 : index
    %c0_12 = arith.constant 0 : index
    %c128 = arith.constant 128 : index
    %14 = vector.load %arg2[%c0_11, %c0_12, %c128] : memref<1x4x256xf32, #tpu.memory_space<vmem>>, vector<1x4x128xf32>
    %15 = vector.shape_cast %14 : vector<1x4x128xf32> to vector<4x128xf32>
    %cst_13 = arith.constant dense<0.000000e+00> : vector<8x128xf32>
    %16 = tpu.matmul %3, %15, %cst_13 {dimension_numbers = #tpu.dot_dimension_numbers<[1], [0], [0], [1], [0, 0, 1, 1], [], []>} : vector<8x4xf32>, vector<4x128xf32>, vector<8x128xf32> -> vector<8x128xf32>
    %17 = arith.addf %11, %16 : vector<8x128xf32>
    %18 = arith.mulf %16, %16 : vector<8x128xf32>
    %19 = arith.addf %13, %18 : vector<8x128xf32>
    %c0_14 = arith.constant 0 : index
    %c0_15 = arith.constant 0 : index
    %c0_16 = arith.constant 0 : index
    %20 = vector.load %arg4[%c0_14, %c0_15, %c0_16] : memref<1x8x128xf32, #tpu.memory_space<vmem>>, vector<1x8x128xf32>
    %21 = vector.shape_cast %20 : vector<1x8x128xf32> to vector<8x128xf32>
    %22 = vector.shape_cast %17 : vector<8x128xf32> to vector<1x8x128xf32>
    tpu.vector_store %arg4[%c0_14, %c0_15, %c0_16], %22 {strides = array<i32>} : memref<1x8x128xf32, #tpu.memory_space<vmem>>, vector<1x8x128xf32>,
    %c0_17 = arith.constant 0 : index
    %c0_18 = arith.constant 0 : index
    %c0_19 = arith.constant 0 : index
    %23 = vector.load %arg5[%c0_17, %c0_18, %c0_19] : memref<1x8x128xf32, #tpu.memory_space<vmem>>, vector<1x8x128xf32>
    %24 = vector.shape_cast %23 : vector<1x8x128xf32> to vector<8x128xf32>
    %25 = vector.shape_cast %19 : vector<8x128xf32> to vector<1x8x128xf32>
    tpu.vector_store %arg5[%c0_17, %c0_18, %c0_19], %25 {strides = array<i32>} : memref<1x8x128xf32, #tpu.memory_space<vmem>>, vector<1x8x128xf32>,
    return
  }
  func.func @transform_0(%arg0: i32, %arg1: i32) -> (i32, i32, i32) {
    %c0_i32 = arith.constant 0 : i32
    %c0_i32_0 = arith.constant 0 : i32
    return %arg0, %c0_i32, %arg1 : i32, i32, i32
  }
  func.func @transform_1(%arg0: i32, %arg1: i32) -> (i32, i32) {
    %c0_i32 = arith.constant 0 : i32
    %c0_i32_0 = arith.constant 0 : i32
    %c0_i32_1 = arith.constant 0 : i32
    return %c0_i32, %c0_i32_0 : i32, i32
  }
  func.func @transform_2(%arg0: i32, %arg1: i32) -> (i32, i32, i32) {
    %c0_i32 = arith.constant 0 : i32
    %c0_i32_0 = arith.constant 0 : i32
    %c0_i32_1 = arith.constant 0 : i32
    return %arg0, %c0_i32, %c0_i32_0 : i32, i32, i32
  }
  func.func @transform_3(%arg0: i32, %arg1: i32) -> (i32, i32, i32) {
    %c0_i32 = arith.constant 0 : i32
    %c0_i32_0 = arith.constant 0 : i32
    %c0_i32_1 = arith.constant 0 : i32
    return %arg0, %c0_i32, %c0_i32_0 : i32, i32, i32
  }
}

</mosaic_0001>

<llo_original>
// kernel: tpu_custom_call.1
$region0: #{tpu_custom_call.1}
  #allocation0 [shape = 'u32[]', space=smem, size = 0x4, offset = 0x4, fixed_abs, tag = 'smem constant byte address 0x4 - core index']
  #allocation1 [shape = 'u32[144,128]{1,0:T(1,128)}', space=vmem, size = 0x12000, scoped, tag = 'internal scratch']
  %s0 = inlined_call_operand.hbm [shape: f32[2,4,256], index: 0, kind: input, shape index: {}]
  %s1 = inlined_call_operand.vmem [shape: f32[8,4], index: 1, kind: input, shape index: {}]
  %s2 = inlined_call_operand.hbm [shape: f32[2,8,128], index: 2, kind: output, shape index: {0}]
  %s3 = inlined_call_operand.hbm [shape: f32[2,8,128], index: 3, kind: output, shape index: {1}]
  %4 = xla_tuple %s2, %s3
  %s5 = sld [smem:[#allocation0]]
  $region57: #{tpu_custom_call.1} parent=0
    _
  %s7 = ssub.s32 1, %s5
  %s8 = scalar_select 0, %s7, %s5
  $region1: #{tpu_custom_call.1} parent=0
    #allocation2 [shape = 'u8[8192]{0}', space=vmem, size = 0x2000, scoped, tag = 'input window, operand 0']
    #allocation3 [shape = 's32[2]{0}', space=sflag, size = 0x8, scoped, tag = 'scoped memory for tpu_custom_call.1']
    #allocation4 [shape = 's32[2]{0}', space=sflag, size = 0x8, scoped, tag = 'scoped memory for tpu_custom_call.1']
    #allocation5 [shape = 'u8[8192]{0}', space=vmem, size = 0x2000, scoped, tag = 'output window, operand 0']
    #allocation6 [shape = 'u8[8192]{0}', space=vmem, size = 0x2000, scoped, tag = 'output window, operand 1']
    #allocation7 [shape = 's32[2]{0}', space=sflag, size = 0x8, scoped, tag = 'scoped memory for tpu_custom_call.1']
    %9 = vsyncpa [#allocation3], 0
    %s10 = scalar_lea.sflag [#allocation3], 1
    %11 = vsyncpa %s10, 0
    %12 = vsyncpa [#allocation4], 0
    %s13 = scalar_lea.sflag [#allocation4], 1
    %14 = vsyncpa %s13, 0
    %15 = vsyncpa [#allocation7], 0
    %s16 = scalar_lea.sflag [#allocation7], 1
    %17 = vsyncpa %s16, 0
    loop: start=0, step=1, limit=4
    $region2: #{tpu_custom_call.1} parent=1 // loop_pre_header
      _
    $region3: #{tpu_custom_call.1} parent=1 // loop_header
      %s19 = sphi 0, %s23
      %p20 = scmp.ge.s32.totalorder %s19, 4
      %s26 = sphi 0, %s38
      %s27 = sphi 0, %s34
      %s28 = sphi 0, %s26
      %s29 = sphi 0, %s27
      %s30 = sphi 0, %s28
      %s31 = sphi 0, %s29
      %s43 = sphi 0, %s45
      %s46 = sphi 0, %s43
      %s47 = sphi 0, %s46
      %s63 = sphi 0, %s47
      %s67 = sphi 0, %s67
      %s69 = sphi 0, %s67
      %s70 = sphi 0, %s69
      %s84 = sphi 0, %s70
      %s90 = sphi 0, %s92
      %s93 = sphi 0, %s90
      %s94 = sphi 0, %s93
      %s110 = sphi 0, %s94
      %s116 = sphi 0, %s118
      %s119 = sphi 0, %s116
      %s120 = sphi 0, %s119
      %s136 = sphi 0, %s120
    $region4: #{tpu_custom_call.1} parent=1 // loop_header_branch
      %22 = sbr.rel (%p20) target = $region8
    $region5: #{tpu_custom_call.1} parent=1 // loop_body
      %s24 = ssub.s32 %s19, 1
      %s25 = ssub.s32 %s19, 2
      %s32 = sadd.s32 1, %s27
      %p33 = scmp.ge.s32.totalorder %s32, 1
      %s34 = scalar_select %p33, 0, %s32
      %s35 = sadd.s32 1, %s26
      %s36 = scalar_select %p33, %s35, %s26
      %p37 = scmp.ge.s32.totalorder %s36, 2
      %s38 = scalar_select %p37, 0, %s36
      %s39 = ssub.s32 %s26, %s38
      %s40 = ssub.s32 %s27, %s34
      %s41 = sor.u32 %s39, %s40
      %p42 = scmp.eq.s32.totalorder %s41, 0
      %s44 = sadd.s32 %s43, 1
      %s45 = scalar_select %p42, %s43, %s44
      %p48 = pneg %p42
      %p49 = scmp.eq.s32.totalorder %s19, 1
      %p50 = por %p48, %p49
      %p51 = scmp.ne.s32.totalorder %s43, %s46
      %p52 = scmp.eq.s32.totalorder %s19, 0
      %p53 = por %p51, %p52
      %p54 = scmp.ne.s32.totalorder %s43, %s46
      %p55 = scmp.eq.s32.totalorder %s24, 1
      %p56 = por %p54, %p55
      %p57 = scmp.ne.s32.totalorder %s46, %s47
      %p58 = scmp.eq.s32.totalorder %s24, 0
      %p59 = por %p57, %p58
      %p60 = scmp.ne.s32.totalorder %s46, %s47
      %p61 = scmp.eq.s32.totalorder %s25, 1
      %p62 = por %p60, %p61
      %p64 = scmp.ne.s32.totalorder %s47, %s63
      %p65 = scmp.eq.s32.totalorder %s25, 0
      %p66 = por %p64, %p65
      %s68 = sadd.s32 %s67, 1
      %p71 = scmp.eq.s32.totalorder %s19, 1
      %p72 = scmp.ne.s32.totalorder %s67, %s69
      %p73 = scmp.eq.s32.totalorder %s19, 0
      %p74 = por %p72, %p73
      %p75 = scmp.ne.s32.totalorder %s67, %s69
      %p76 = scmp.eq.s32.totalorder %s24, 1
      %p77 = por %p75, %p76
      %p78 = scmp.ne.s32.totalorder %s69, %s70
      %p79 = scmp.eq.s32.totalorder %s24, 0
      %p80 = por %p78, %p79
      %p81 = scmp.ne.s32.totalorder %s69, %s70
      %p82 = scmp.eq.s32.totalorder %s25, 1
      %p83 = por %p81, %p82
      %p85 = scmp.ne.s32.totalorder %s70, %s84
      %p86 = scmp.eq.s32.totalorder %s25, 0
      %p87 = por %p85, %p86
      %s88 = ssub.s32 %s26, %s38
      %p89 = scmp.eq.s32.totalorder %s88, 0
      %s91 = sadd.s32 %s90, 1
      %s92 = scalar_select %p89, %s90, %s91
      %p95 = pneg %p89
      %p96 = scmp.eq.s32.totalorder %s19, 1
      %p97 = por %p95, %p96
      %p98 = scmp.ne.s32.totalorder %s90, %s93
      %p99 = scmp.eq.s32.totalorder %s19, 0
      %p100 = por %p98, %p99
      %p101 = scmp.ne.s32.totalorder %s90, %s93
      %p102 = scmp.eq.s32.totalorder %s24, 1
      %p103 = por %p101, %p102
      %p104 = scmp.ne.s32.totalorder %s93, %s94
      %p105 = scmp.eq.s32.totalorder %s24, 0
      %p106 = por %p104, %p105
      %p107 = scmp.ne.s32.totalorder %s93, %s94
      %p108 = scmp.eq.s32.totalorder %s25, 1
      %p109 = por %p107, %p108
      %p111 = scmp.ne.s32.totalorder %s94, %s110
      %p112 = scmp.eq.s32.totalorder %s25, 0
      %p113 = por %p111, %p112
      %s114 = ssub.s32 %s26, %s38
      %p115 = scmp.eq.s32.totalorder %s114, 0
      %s117 = sadd.s32 %s116, 1
      %s118 = scalar_select %p115, %s116, %s117
      %p121 = pneg %p115
      %p122 = scmp.eq.s32.totalorder %s19, 1
      %p123 = por %p121, %p122
      %p124 = scmp.ne.s32.totalorder %s116, %s119
      %p125 = scmp.eq.s32.totalorder %s19, 0
      %p126 = por %p124, %p125
      %p127 = scmp.ne.s32.totalorder %s116, %s119
      %p128 = scmp.eq.s32.totalorder %s24, 1
      %p129 = por %p127, %p128
      %p130 = scmp.ne.s32.totalorder %s119, %s120
      %p131 = scmp.eq.s32.totalorder %s24, 0
      %p132 = por %p130, %p131
      %p133 = scmp.ne.s32.totalorder %s119, %s120
      %p134 = scmp.eq.s32.totalorder %s25, 1
      %p135 = por %p133, %p134
      %p137 = scmp.ne.s32.totalorder %s120, %s136
      %p138 = scmp.eq.s32.totalorder %s25, 0
      %p139 = por %p137, %p138
      %p140 = scmp.le.s32.totalorder 1, %s19
      %p141 = scmp.lt.s32.totalorder %s19, 3
      %p142 = pnand %p140, %p141
      %p143 = pneg %p142
      // Predicated region
      $region9: #{tpu_custom_call.1} parent=5 // pred_check
        _
      $region10: #{tpu_custom_call.1} parent=5 // pred_check_branch
        %145 = sbr.rel (%p142) target = $region12
      $region11: #{tpu_custom_call.1} parent=5 // pred_region
        %s146 = ssub.s32 %s19, 1
        // Predicated region
        $region13: #{tpu_custom_call.1} parent=11 // pred_check
          %p147 = pneg %p80
        $region14: #{tpu_custom_call.1} parent=11 // pred_check_branch
          %149 = sbr.rel (%p147) target = $region16
        $region15: #{tpu_custom_call.1} parent=11 // pred_region
          _
        $region16: #{tpu_custom_call.1} parent=11 // pred_fallthru
          _
      $region12: #{tpu_custom_call.1} parent=5 // pred_fallthru
        _
      %p150 = scmp.lt.s32.totalorder %s19, 2
      // Predicated region
      $region17: #{tpu_custom_call.1} parent=5 // pred_check
        %p151 = pneg %p150
      $region18: #{tpu_custom_call.1} parent=5 // pred_check_branch
        %153 = sbr.rel (%p151) target = $region20
      $region19: #{tpu_custom_call.1} parent=5 // pred_region
        // Predicated region
        $region21: #{tpu_custom_call.1} parent=19 // pred_check
          %p154 = pneg %p53
        $region22: #{tpu_custom_call.1} parent=19 // pred_check_branch
          %156 = sbr.rel (%p154) target = $region24
        $region23: #{tpu_custom_call.1} parent=19 // pred_region
          %s157 = sand.u32 %s43, 1
          %s158 = scalar_lea.sflag [#allocation3], %s157
          %s159 = sand.u32 %s43, 1
          %s160 = smul.addr %s159, 8
          %s161 = scalar_lea.vmem [#allocation2], %s160
          %s162 = smul.u32 2, %s27
          %s164 = ssub.s32 128, 128
          %165 = vsyncadd %s158, %s164
          %s166 = smul.addr %s26, 2
          %s167 = sadd.s32 %s162, %s166
          %s168 = smul.addr %s167, 64
          %s169 = scalar_lea.hbm %s0, %s168
          %s171 = sshll.u32 %s161, 4
          %s172 = int_to_ptr.vmem [resolvable:$true] %s171
          %174 = dma.hbm_to_vmem [thread:$0]  %s169, 128, %s172, %s158
        $region24: #{tpu_custom_call.1} parent=19 // pred_fallthru
          _
      $region20: #{tpu_custom_call.1} parent=5 // pred_fallthru
        _
      %p175 = scmp.le.s32.totalorder 1, %s19
      %p176 = scmp.lt.s32.totalorder %s19, 3
      %p177 = pnand %p175, %p176
      %p178 = pneg %p177
      // Predicated region
      $region25: #{tpu_custom_call.1} parent=5 // pred_check
        _
      $region26: #{tpu_custom_call.1} parent=5 // pred_check_branch
        %180 = sbr.rel (%p177) target = $region28
      $region27: #{tpu_custom_call.1} parent=5 // pred_region
        %s181 = ssub.s32 %s19, 1
        %s182 = sand.u32 %s46, 1
        %s183 = scalar_lea.sflag [#allocation3], %s182
        %s184 = sand.u32 %s46, 1
        %s185 = smul.addr %s184, 8
        %s186 = scalar_lea.vmem [#allocation2], %s185
        // Predicated region
        $region29: #{tpu_custom_call.1} parent=27 // pred_check
          %p187 = pneg %p59
        $region30: #{tpu_custom_call.1} parent=27 // pred_check_branch
          %189 = sbr.rel (%p187) target = $region32
        $region31: #{tpu_custom_call.1} parent=27 // pred_region
          %190 = dma.done %s183, 128
        $region32: #{tpu_custom_call.1} parent=27 // pred_fallthru
          _
        %s191 = sand.u32 %s46, 1
        %s192 = scalar_lea.sflag [#allocation3], %s191
        %s193 = sand.u32 %s46, 1
        %s194 = smul.addr %s193, 8
        %s195 = scalar_lea.vmem [#allocation2], %s194
        %p196 = pneg %p59
        %p197 = pneg %p56
        %p198 = pneg %p80
        %p199 = pneg %p77
        %p200 = pneg %p106
        %p201 = pneg %p103
        %s202 = sand.u32 %s93, 1
        %s203 = scalar_lea.sflag [#allocation4], %s202
        %s204 = sand.u32 %s93, 1
        %s205 = smul.addr %s204, 8
        %s206 = scalar_lea.vmem [#allocation5], %s205
        %p207 = pneg %p132
        %p208 = pneg %p129
        %s209 = sand.u32 %s119, 1
        %s210 = scalar_lea.sflag [#allocation7], %s209
        %s211 = sand.u32 %s119, 1
        %s212 = smul.addr %s211, 8
        %s213 = scalar_lea.vmem [#allocation6], %s212
        %s214 = smul.u32 2, %s29
        %p215 = scmp.eq.s32.totalorder %s29, 0
        // Predicated region
        $region33: #{tpu_custom_call.1} parent=27 // pred_check
          %p216 = pneg %p215
        $region34: #{tpu_custom_call.1} parent=27 // pred_check_branch
          %218 = sbr.rel (%p216) target = $region36
        $region35: #{tpu_custom_call.1} parent=27 // pred_region
          %219 = vst [vmem:[%s206] sm:$0xff] 0.0
          %220 = vst [vmem:[%s213] sm:$0xff] 0.0
        $region36: #{tpu_custom_call.1} parent=27 // pred_fallthru
          _
        %v221 = vld [vmem:[%s1] sm:$0xff]
        %v222 = vld [vmem:[%s206] sm:$0xff]
        %v223 = vld [vmem:[%s213] sm:$0xff]
        %v224 = vld [vmem:[%s186] sm:$0xf]
        %vm225 = vcmask 31744
        %v227 = vsel %vm225, %v221, 0
        %vm229 = vcmask 1043456
        %v231 = vsel %vm229, %v224, 0
        %233 = vmatprep.subr.mxu0 0.0
        %234 = vmatpush1.msra.mxu0 %v231
        %235 = vmatprep.subr.mxu0 0.0
        %236 = vmatpush1.msra.mxu0 0.0
        %237 = vmatprep.subr.mxu0 0.0
        %238 = vmatpush1.msra.mxu0 0.0
        %239 = vmatprep.subr.mxu0 0.0
        %240 = vmatpush1.msra.mxu0 0.0
        %241 = vmatprep.subr.mxu0 0.0
        %242 = vmatpush1.msra.mxu0 0.0
        %243 = vmatprep.subr.mxu0 0.0
        %244 = vmatpush1.msra.mxu0 0.0
        %245 = vmatprep.subr.mxu0 0.0
        %246 = vmatpush1.msra.mxu0 0.0
        %247 = vmatprep.subr.mxu0 0.0
        %248 = vmatpush1.msra.mxu0 0.0
        %249 = vmatprep.subr.mxu0 0.0
        %250 = vmatpush1.msra.mxu0 0.0
        %251 = vmatprep.subr.mxu0 0.0
        %252 = vmatpush1.msra.mxu0 0.0
        %253 = vmatprep.subr.mxu0 0.0
        %254 = vmatpush1.msra.mxu0 0.0
        %255 = vmatprep.subr.mxu0 0.0
        %256 = vmatpush1.msra.mxu0 0.0
        %257 = vmatprep.subr.mxu0 0.0
        %258 = vmatpush1.msra.mxu0 0.0
        %259 = vmatprep.subr.mxu0 0.0
        %260 = vmatpush1.msra.mxu0 0.0
        %261 = vmatprep.subr.mxu0 0.0
        %262 = vmatpush1.msra.mxu0 0.0
        %263 = vmatprep.subr.mxu0 0.0
        %264 = vmatpush1.msra.mxu0 0.0
        %265 = vmatprep.subr.mxu0 0.0
        %266 = vmatpush1.msra.mxu0 0.0
        %267 = vmatprep.subr.mxu0 0.0
        %268 = vmatpush1.msra.mxu0 0.0
        %269 = vmatprep.subr.mxu0 0.0
        %270 = vmatpush1.msra.mxu0 0.0
        %271 = vmatprep.subr.mxu0 0.0
        %272 = vmatpush1.msra.mxu0 0.0
        %273 = vmatprep.subr.mxu0 0.0
        %274 = vmatpush1.msra.mxu0 0.0
        %275 = vmatprep.subr.mxu0 0.0
        %276 = vmatpush1.msra.mxu0 0.0
        %277 = vmatprep.subr.mxu0 0.0
        %278 = vmatpush1.msra.mxu0 0.0
        %279 = vmatprep.subr.mxu0 0.0
        %280 = vmatpush1.msra.mxu0 0.0
        %281 = vmatprep.subr.mxu0 0.0
        %282 = vmatpush1.msra.mxu0 0.0
        %283 = vmatprep.subr.mxu0 0.0
        %284 = vmatpush1.msra.mxu0 0.0
        %285 = vmatprep.subr.mxu0 0.0
        %286 = vmatpush1.msra.mxu0 0.0
        %287 = vmatprep.subr.mxu0 0.0
        %288 = vmatpush1.msra.mxu0 0.0
        %289 = vmatprep.subr.mxu0 0.0
        %290 = vmatpush1.msra.mxu0 0.0
        %291 = vmatprep.subr.mxu0 0.0
        %292 = vmatpush1.msra.mxu0 0.0
        %293 = vmatprep.subr.mxu0 0.0
        %294 = vmatpush1.msra.mxu0 0.0
        %295 = vmatprep.subr.mxu0 0.0
        %296 = vmatpush1.msra.mxu0 0.0
        %297 = vmatprep.mubr.f32.mxu0 0.0
        %298 = vmatmul.mubr.f32.gmra.mrb[0].mxu0 %v227
        %v299 = vpop.f32.mrb[0].mxu0
        %v300 = vadd.f32 0.0, %v299
        %v301 = vpop.f32.mrb[0].mxu0
        %302 = vdwg.mxu0
        %v303 = vadd.f32 %v222, %v300
        %v304 = vmul.f32 %v300, %v300
        %v305 = vadd.f32 %v223, %v304
        %v306 = vld [vmem:[%s186 + $0x4] sm:$0xf]
        %v308 = vsel %vm229, %v306, 0
        %310 = vmatprep.subr.mxu0 0.0
        %311 = vmatpush1.msra.mxu0 %v308
        %312 = vmatprep.subr.mxu0 0.0
        %313 = vmatpush1.msra.mxu0 0.0
        %314 = vmatprep.subr.mxu0 0.0
        %315 = vmatpush1.msra.mxu0 0.0
        %316 = vmatprep.subr.mxu0 0.0
        %317 = vmatpush1.msra.mxu0 0.0
        %318 = vmatprep.subr.mxu0 0.0
        %319 = vmatpush1.msra.mxu0 0.0
        %320 = vmatprep.subr.mxu0 0.0
        %321 = vmatpush1.msra.mxu0 0.0
        %322 = vmatprep.subr.mxu0 0.0
        %323 = vmatpush1.msra.mxu0 0.0
        %324 = vmatprep.subr.mxu0 0.0
        %325 = vmatpush1.msra.mxu0 0.0
        %326 = vmatprep.subr.mxu0 0.0
        %327 = vmatpush1.msra.mxu0 0.0
        %328 = vmatprep.subr.mxu0 0.0
        %329 = vmatpush1.msra.mxu0 0.0
        %330 = vmatprep.subr.mxu0 0.0
        %331 = vmatpush1.msra.mxu0 0.0
        %332 = vmatprep.subr.mxu0 0.0
        %333 = vmatpush1.msra.mxu0 0.0
        %334 = vmatprep.subr.mxu0 0.0
        %335 = vmatpush1.msra.mxu0 0.0
        %336 = vmatprep.subr.mxu0 0.0
        %337 = vmatpush1.msra.mxu0 0.0
        %338 = vmatprep.subr.mxu0 0.0
        %339 = vmatpush1.msra.mxu0 0.0
        %340 = vmatprep.subr.mxu0 0.0
        %341 = vmatpush1.msra.mxu0 0.0
        %342 = vmatprep.subr.mxu0 0.0
        %343 = vmatpush1.msra.mxu0 0.0
        %344 = vmatprep.subr.mxu0 0.0
        %345 = vmatpush1.msra.mxu0 0.0
        %346 = vmatprep.subr.mxu0 0.0
        %347 = vmatpush1.msra.mxu0 0.0
        %348 = vmatprep.subr.mxu0 0.0
        %349 = vmatpush1.msra.mxu0 0.0
        %350 = vmatprep.subr.mxu0 0.0
        %351 = vmatpush1.msra.mxu0 0.0
        %352 = vmatprep.subr.mxu0 0.0
        %353 = vmatpush1.msra.mxu0 0.0
        %354 = vmatprep.subr.mxu0 0.0
        %355 = vmatpush1.msra.mxu0 0.0
        %356 = vmatprep.subr.mxu0 0.0
        %357 = vmatpush1.msra.mxu0 0.0
        %358 = vmatprep.subr.mxu0 0.0
        %359 = vmatpush1.msra.mxu0 0.0
        %360 = vmatprep.subr.mxu0 0.0
        %361 = vmatpush1.msra.mxu0 0.0
        %362 = vmatprep.subr.mxu0 0.0
        %363 = vmatpush1.msra.mxu0 0.0
        %364 = vmatprep.subr.mxu0 0.0
        %365 = vmatpush1.msra.mxu0 0.0
        %366 = vmatprep.subr.mxu0 0.0
        %367 = vmatpush1.msra.mxu0 0.0
        %368 = vmatprep.subr.mxu0 0.0
        %369 = vmatpush1.msra.mxu0 0.0
        %370 = vmatprep.subr.mxu0 0.0
        %371 = vmatpush1.msra.mxu0 0.0
        %372 = vmatprep.subr.mxu0 0.0
        %373 = vmatpush1.msra.mxu0 0.0
        %374 = vmatprep.mubr.f32.mxu0 0.0
        %375 = vmatmul.mubr.f32.gmra.mrb[0].mxu0 %v227
        %v376 = vpop.f32.mrb[0].mxu0
        %v377 = vadd.f32 0.0, %v376
        %v378 = vpop.f32.mrb[0].mxu0
        %379 = vdwg.mxu0
        %v380 = vadd.f32 %v303, %v377
        %v381 = vmul.f32 %v377, %v377
        %v382 = vadd.f32 %v305, %v381
        %383 = vst [vmem:[%s206] sm:$0xff] %v380
        %384 = vst [vmem:[%s213] sm:$0xff] %v382
        %s385 = sand.u32 %s93, 1
        %s386 = scalar_lea.sflag [#allocation4], %s385
        %s387 = sand.u32 %s93, 1
        %s388 = smul.addr %s387, 8
        %s389 = scalar_lea.vmem [#allocation5], %s388
        %s390 = sand.u32 %s119, 1
        %s391 = scalar_lea.sflag [#allocation7], %s390
        %s392 = sand.u32 %s119, 1
        %s393 = smul.addr %s392, 8
        %s394 = scalar_lea.vmem [#allocation6], %s393
        // Predicated region
        $region37: #{tpu_custom_call.1} parent=27 // pred_check
          %p395 = pneg %p103
        $region38: #{tpu_custom_call.1} parent=27 // pred_check_branch
          %397 = sbr.rel (%p395) target = $region40
        $region39: #{tpu_custom_call.1} parent=27 // pred_region
          %s399 = ssub.s32 128, 128
          %400 = vsyncadd %s386, %s399
          %s401 = smul.addr %s28, 128
          %s402 = scalar_lea.hbm %s2, %s401
          %s404 = sshll.u32 %s389, 4
          %s405 = int_to_ptr.vmem [resolvable:$true] %s404
          %407 = dma.vmem_to_hbm [thread:$0]  %s405, 128, %s402, %s386
        $region40: #{tpu_custom_call.1} parent=27 // pred_fallthru
          _
        // Predicated region
        $region41: #{tpu_custom_call.1} parent=27 // pred_check
          %p408 = pneg %p129
        $region42: #{tpu_custom_call.1} parent=27 // pred_check_branch
          %410 = sbr.rel (%p408) target = $region44
        $region43: #{tpu_custom_call.1} parent=27 // pred_region
          %s412 = ssub.s32 128, 128
          %413 = vsyncadd %s391, %s412
          %s414 = smul.addr %s28, 128
          %s415 = scalar_lea.hbm %s3, %s414
          %s417 = sshll.u32 %s394, 4
          %s418 = int_to_ptr.vmem [resolvable:$true] %s417
          %420 = dma.vmem_to_hbm [thread:$0]  %s418, 128, %s415, %s391
        $region44: #{tpu_custom_call.1} parent=27 // pred_fallthru
          _
      $region28: #{tpu_custom_call.1} parent=5 // pred_fallthru
        _
      %p421 = scmp.le.s32.totalorder 2, %s19
      // Predicated region
      $region45: #{tpu_custom_call.1} parent=5 // pred_check
        %p422 = pneg %p421
      $region46: #{tpu_custom_call.1} parent=5 // pred_check_branch
        %424 = sbr.rel (%p422) target = $region48
      $region47: #{tpu_custom_call.1} parent=5 // pred_region
        %s425 = ssub.s32 %s19, 2
        // Predicated region
        $region49: #{tpu_custom_call.1} parent=47 // pred_check
          %p426 = pneg %p109
        $region50: #{tpu_custom_call.1} parent=47 // pred_check_branch
          %428 = sbr.rel (%p426) target = $region52
        $region51: #{tpu_custom_call.1} parent=47 // pred_region
          %s429 = sand.u32 %s94, 1
          %s430 = scalar_lea.sflag [#allocation4], %s429
          %s431 = sand.u32 %s94, 1
          %s432 = smul.addr %s431, 8
          %s433 = scalar_lea.vmem [#allocation5], %s432
          %434 = dma.done %s430, 128
        $region52: #{tpu_custom_call.1} parent=47 // pred_fallthru
          _
        // Predicated region
        $region53: #{tpu_custom_call.1} parent=47 // pred_check
          %p435 = pneg %p135
        $region54: #{tpu_custom_call.1} parent=47 // pred_check_branch
          %437 = sbr.rel (%p435) target = $region56
        $region55: #{tpu_custom_call.1} parent=47 // pred_region
          %s438 = sand.u32 %s120, 1
          %s439 = scalar_lea.sflag [#allocation7], %s438
          %s440 = sand.u32 %s120, 1
          %s441 = smul.addr %s440, 8
          %s442 = scalar_lea.vmem [#allocation6], %s441
          %443 = dma.done %s439, 128
        $region56: #{tpu_custom_call.1} parent=47 // pred_fallthru
          _
      $region48: #{tpu_custom_call.1} parent=5 // pred_fallthru
        _
    $region6: #{tpu_custom_call.1} parent=1 // loop_footer
      %s23 = sadd.s32 1, %s19
    $region7: #{tpu_custom_call.1} parent=1 // loop_footer_branch
      %18 = sbr.rel target = $region3
    $region8: #{tpu_custom_call.1} parent=1 // loop_exit
      _
    %444 = vsyncpa [#allocation3], 1
    %s445 = scalar_lea.sflag [#allocation3], 1
    %446 = vsyncpa %s445, 1
    %447 = vsyncpa [#allocation4], 1
    %s448 = scalar_lea.sflag [#allocation4], 1
    %449 = vsyncpa %s448, 1
    %450 = vsyncpa [#allocation7], 1
    %s451 = scalar_lea.sflag [#allocation7], 1
    %452 = vsyncpa %s451, 1

</llo_original>
